<compile_context>
chip_gen: v5e
topology: v5e:2x2
jax: 0.10.0
libtpu: 0.0.40
codegen_flags: <defaults>
</compile_context>

<pallas_src>
import functools

import jax
import jax.numpy as jnp
from jax.experimental import pallas as pl
from jax.experimental.pallas import tpu as pltpu

PHYSICS_LS = 128
HIDDEN = 64


def _round_up(n, m):
    return ((n + m - 1) // m) * m


def fhead_kernel(scalars_ref,                   # SMEM: [beta1, beta2, b2]
                 x_ref, w1_ref, bw_ref,         # VMEM tiles
                 o_ref,                         # VMEM: (1, 1, TB) lane-dense row
                 *, compute_dtype):
    beta1 = scalars_ref[0]
    beta2 = scalars_ref[1]
    b2 = scalars_ref[2]

    # ---- Linear(128, 64) on the MXU: bf16 operands, f32 accumulation ----
    x = x_ref[...].astype(jnp.bfloat16)                               # no-op if x is bf16
    h = jnp.dot(x, w1_ref[...], preferred_element_type=jnp.float32)   # (TB, 64) f32

    b1 = bw_ref[0:1, :]                                               # (1, 64) f32
    w2 = bw_ref[1:2, :]                                               # (1, 64) f32 == w2[:, 0]

    h = (h + b1).astype(compute_dtype)
    # swish(x) = x * sigmoid(beta*x) = 0.5 * x * (tanh(0.5*beta*x) + 1)
    #   -> a single EUP tanh per element instead of exp + divide.
    half_beta1 = (0.5 * beta1).astype(compute_dtype)
    h = (0.5 * h) * (jnp.tanh(half_beta1 * h) + 1.0)

    # ---- Linear(64, 1): kept off the MXU (an N=1 matmul wastes 255/256 columns).
    # VPU multiply by the w2 row, XLU transpose so the batch lives on lanes,
    # then a sublane reduction in f32 -> lane-dense (1, TB) result.
    hw = h * w2.astype(compute_dtype)                                 # (TB, 64)
    y = jnp.sum(hw.astype(jnp.float32).T, axis=0, keepdims=True)      # (1, TB) f32
    y = y + b2
    y = (0.5 * y) * (jnp.tanh((0.5 * beta2) * y) + 1.0)               # swish, f32
    o_ref[0] = y.astype(o_ref.dtype)


@functools.partial(jax.jit, static_argnames=("nout", "block_rows", "compute_dtype"))
def fhead_forward(x, w1, b1, beta1, w2, b2, beta2, *,
                  nout=1, block_rows=4096, compute_dtype=jnp.float32):
    """x: (B,128)  w1: (128,64)  b1: (64,)  w2: (64,nout)  b2: (nout,).

    Pass x as bf16 to halve HBM traffic (the kernel cast becomes a no-op).
    compute_dtype=jnp.bfloat16 is recommended on v6e/v7x; keep f32 on v5e.
    """
    assert nout == 1  # TODO(synk): nout > 1 path ((TB, nout) output block, no squeeze) not specialized here.
    B, D = x.shape
    assert D == PHYSICS_LS

    # Batch tile: multiple of 128 (batch maps to lanes in the output row).
    # Capped at block_rows (VMEM) and so that the grid has >= 2 (ideally >= 4)
    # blocks for moderate B -> both v7x TensorCores get work via "parallel".
    target_blocks = 4 if B >= 4 * 128 else (2 if B >= 2 * 128 else 1)
    TB = min(_round_up(block_rows, 128),
             max(128, _round_up(pl.cdiv(B, target_blocks), 128)))
    nblocks = pl.cdiv(B, TB)
    # NOTE: if block_rows is pushed to >= 8192 with f32 x, set
    # pltpu.CompilerParams(vmem_limit_bytes=...) explicitly (v5e scoped default
    # is only 16 MiB).  At the 4096 default all generations fit comfortably.

    w1_bf16 = w1.astype(jnp.bfloat16)                        # (128, 64), stays resident
    bw = jnp.stack([b1, w2[:, 0]]).astype(jnp.float32)       # (2, 64): [b1 ; w2 row]
    scalars = jnp.concatenate([
        jnp.reshape(jnp.asarray(beta1, jnp.float32), (1,)),
        jnp.reshape(jnp.asarray(beta2, jnp.float32), (1,)),
        jnp.reshape(jnp.asarray(b2, jnp.float32), (1,)),
    ])

    x_bytes = B * PHYSICS_LS * jnp.dtype(x.dtype).itemsize
    cost = pl.CostEstimate(
        flops=2 * B * PHYSICS_LS * HIDDEN + 8 * B * HIDDEN + 6 * B,
        transcendentals=B * (HIDDEN + 1),
        bytes_accessed=x_bytes + B * 4 + w1_bf16.size * 2 + bw.size * 4 + 12,
    )

    kernel = functools.partial(fhead_kernel, compute_dtype=compute_dtype)

    out = pl.pallas_call(
        kernel,
        out_shape=jax.ShapeDtypeStruct((nblocks, 1, TB), jnp.float32),
        grid=(nblocks,),
        in_specs=[
            pl.BlockSpec(memory_space=pltpu.MemorySpace.SMEM),      # [beta1, beta2, b2]
            pl.BlockSpec((TB, PHYSICS_LS), lambda i: (i, 0)),       # x tile (pipelined; ragged tail OK)
            pl.BlockSpec((PHYSICS_LS, HIDDEN), lambda i: (0, 0)),   # w1 (constant block)
            pl.BlockSpec((2, HIDDEN), lambda i: (0, 0)),            # [b1 ; w2 row]
        ],
        out_specs=pl.BlockSpec((1, 1, TB), lambda i: (i, 0, 0)),    # lane-dense row per tile
        compiler_params=pltpu.CompilerParams(
            dimension_semantics=("parallel",)),
        cost_estimate=cost,
    )(scalars, x, w1_bf16, bw)

    # PyTorch: self.head(v).squeeze(-1) when nout == 1.  Rows >= B in the last
    # (ragged) tile are garbage by construction and dropped here; each output
    # row depends only on its own input row, so this is safe.  Do not add any
    # cross-row reduction downstream of the kernel without masking first.
    return out.reshape(nblocks * TB)[:B]


def fhead_reference(x, w1, b1, beta1, w2, b2, beta2):
    h = x @ w1 + b1
    h = h * jax.nn.sigmoid(beta1 * h)
    y = h @ w2 + b2
    y = y * jax.nn.sigmoid(beta2 * y)
    return y[:, 0]


if __name__ == "__main__":
    key = jax.random.PRNGKey(0)
    k_x, k_w1, k_b1, k_w2, k_b2, k_x2 = jax.random.split(key, 6)

    lim1 = 1.0 / jnp.sqrt(PHYSICS_LS)
    w1 = jax.random.uniform(k_w1, (PHYSICS_LS, HIDDEN), jnp.float32, -lim1, lim1)
    b1 = jax.random.uniform(k_b1, (HIDDEN,), jnp.float32, -lim1, lim1)
    lim2 = 1.0 / jnp.sqrt(HIDDEN)
    w2 = jax.random.uniform(k_w2, (HIDDEN, 1), jnp.float32, -lim2, lim2)
    b2 = jax.random.uniform(k_b2, (1,), jnp.float32, -lim2, lim2)
    beta1 = jnp.float32(1.0)   # ActF beta init = 1.0
    beta2 = jnp.float32(1.0)

    # Small batch: single ragged block (B=8 << TB=128), no padding copy.
    B = 8
    x = jax.random.normal(k_x, (B, PHYSICS_LS), jnp.float32)
    y = fhead_forward(x, w1, b1, beta1, w2, b2, beta2)
    jax.block_until_ready(y)
    y_ref = fhead_reference(x, w1, b1, beta1, w2, b2, beta2)
    assert y.shape == (B,), y.shape
    # bf16 MXU operands with f32 accumulation -> slightly looser tolerance than pure f32.
    assert jnp.allclose(y, y_ref, atol=2e-2, rtol=2e-2), float(jnp.max(jnp.abs(y - y_ref)))

    # Moderate batch: exercises multiple grid blocks + the ragged last tile.
    B2 = 300
    x2 = jax.random.normal(k_x2, (B2, PHYSICS_LS), jnp.float32)
    y2 = fhead_forward(x2, w1, b1, beta1, w2, b2, beta2)
    jax.block_until_ready(y2)
    y2_ref = fhead_reference(x2, w1, b1, beta1, w2, b2, beta2)
    assert y2.shape == (B2,), y2.shape
    assert jnp.allclose(y2, y2_ref, atol=2e-2, rtol=2e-2), float(jnp.max(jnp.abs(y2 - y2_ref)))

    print("KERNEL_OK")
</pallas_src>

<mosaic_0001>
module attributes {stable_mosaic.version = 11 : i64} {
  func.func @fhead_kernel(%arg0: i32, %arg1: memref<3xf32, #tpu.memory_space<smem>>, %arg2: memref<128x128xf32, #tpu.memory_space<vmem>>, %arg3: memref<128x64xbf16, #tpu.memory_space<vmem>>, %arg4: memref<2x64xf32, #tpu.memory_space<vmem>>, %arg5: memref<1x1x128xf32, #tpu.memory_space<vmem>>) attributes {dimension_semantics = [#tpu.dimension_semantics<parallel>], iteration_bounds = array<i64: 1>, scalar_prefetch = 0 : i64, scratch_operands = 0 : i64, tpu.core_type = #tpu.core_type<tc>, window_params = [{transform_indices = @transform_0, window_bounds = array<i64: 3>}, {transform_indices = @transform_1, window_bounds = array<i64: 128, 128>}, {pipeline_mode = #tpu.pipeline_mode<synchronous>, transform_indices = @transform_2, window_bounds = array<i64: 128, 64>}, {pipeline_mode = #tpu.pipeline_mode<synchronous>, transform_indices = @transform_3, window_bounds = array<i64: 2, 64>}, {transform_indices = @transform_4, window_bounds = array<i64: 1, 1, 128>}]} {
    %c0 = arith.constant 0 : index
    %0 = memref.load %arg1[%c0] : memref<3xf32, #tpu.memory_space<smem>>
    %c1 = arith.constant 1 : index
    %1 = memref.load %arg1[%c1] : memref<3xf32, #tpu.memory_space<smem>>
    %c2 = arith.constant 2 : index
    %2 = memref.load %arg1[%c2] : memref<3xf32, #tpu.memory_space<smem>>
    %c0_0 = arith.constant 0 : index
    %c0_1 = arith.constant 0 : index
    %3 = vector.load %arg2[%c0_0, %c0_1] : memref<128x128xf32, #tpu.memory_space<vmem>>, vector<128x128xf32>
    %4 = arith.truncf %3 : vector<128x128xf32> to vector<128x128xbf16>
    %c0_2 = arith.constant 0 : index
    %c0_3 = arith.constant 0 : index
    %5 = vector.load %arg3[%c0_2, %c0_3] : memref<128x64xbf16, #tpu.memory_space<vmem>>, vector<128x64xbf16>
    %cst = arith.constant dense<0.000000e+00> : vector<128x64xf32>
    %6 = tpu.matmul %4, %5, %cst {dimension_numbers = #tpu.dot_dimension_numbers<[1], [0], [0], [1], [0, 0, 1, 1], [], []>} : vector<128x128xbf16>, vector<128x64xbf16>, vector<128x64xf32> -> vector<128x64xf32>
    %c0_4 = arith.constant 0 : index
    %c0_5 = arith.constant 0 : index
    %7 = vector.load %arg4[%c0_4, %c0_5] : memref<2x64xf32, #tpu.memory_space<vmem>>, vector<1x64xf32>
    %c1_6 = arith.constant 1 : index
    %c0_7 = arith.constant 0 : index
    %8 = vector.load %arg4[%c1_6, %c0_7] : memref<2x64xf32, #tpu.memory_space<vmem>>, vector<1x64xf32>
    %9 = vector.broadcast %7 : vector<1x64xf32> to vector<128x64xf32>
    %10 = arith.addf %6, %9 : vector<128x64xf32>
    %cst_8 = arith.constant 5.000000e-01 : f32
    %11 = arith.mulf %cst_8, %0 : f32
    %cst_9 = arith.constant 5.000000e-01 : f32
    %12 = vector.broadcast %cst_9 : f32 to vector<128x64xf32>
    %13 = arith.mulf %12, %10 : vector<128x64xf32>
    %14 = vector.broadcast %11 : f32 to vector<128x64xf32>
    %15 = arith.mulf %14, %10 : vector<128x64xf32>
    %16 = math.tanh %15 : vector<128x64xf32>
    %cst_10 = arith.constant 1.000000e+00 : f32
    %17 = vector.broadcast %cst_10 : f32 to vector<128x64xf32>
    %18 = arith.addf %16, %17 : vector<128x64xf32>
    %19 = arith.mulf %13, %18 : vector<128x64xf32>
    %20 = vector.broadcast %8 : vector<1x64xf32> to vector<128x64xf32>
    %21 = arith.mulf %19, %20 : vector<128x64xf32>
    %22 = tpu.transpose %21, [1, 0] : vector<128x64xf32> -> vector<64x128xf32>
    %cst_11 = arith.constant dense<0.000000e+00> : vector<128xf32>
    %23 = vector.multi_reduction <add>, %22, %cst_11 [0] : vector<64x128xf32> to vector<128xf32>
    %24 = vector.shape_cast %23 : vector<128xf32> to vector<1x128xf32>
    %25 = vector.broadcast %2 : f32 to vector<1x128xf32>
    %26 = arith.addf %24, %25 : vector<1x128xf32>
    %cst_12 = arith.constant 5.000000e-01 : f32
    %27 = vector.broadcast %cst_12 : f32 to vector<1x128xf32>
    %28 = arith.mulf %27, %26 : vector<1x128xf32>
    %cst_13 = arith.constant 5.000000e-01 : f32
    %29 = arith.mulf %cst_13, %1 : f32
    %30 = vector.broadcast %29 : f32 to vector<1x128xf32>
    %31 = arith.mulf %30, %26 : vector<1x128xf32>
    %32 = math.tanh %31 : vector<1x128xf32>
    %cst_14 = arith.constant 1.000000e+00 : f32
    %33 = vector.broadcast %cst_14 : f32 to vector<1x128xf32>
    %34 = arith.addf %32, %33 : vector<1x128xf32>
    %35 = arith.mulf %28, %34 : vector<1x128xf32>
    %c0_15 = arith.constant 0 : index
    %c0_16 = arith.constant 0 : index
    %c0_17 = arith.constant 0 : index
    %36 = vector.load %arg5[%c0_15, %c0_16, %c0_17] : memref<1x1x128xf32, #tpu.memory_space<vmem>>, vector<1x1x128xf32>
    %37 = vector.shape_cast %36 : vector<1x1x128xf32> to vector<1x128xf32>
    %38 = vector.shape_cast %35 : vector<1x128xf32> to vector<1x1x128xf32>
    tpu.vector_store %arg5[%c0_15, %c0_16, %c0_17], %38 {strides = array<i32>} : memref<1x1x128xf32, #tpu.memory_space<vmem>>, vector<1x1x128xf32>,
    return
  }
  func.func @transform_0(%arg0: i32) -> i32 {
    %c0_i32 = arith.constant 0 : i32
    %c0_i32_0 = arith.constant 0 : i32
    return %c0_i32 : i32
  }
  func.func @transform_1(%arg0: i32) -> (i32, i32) {
    %c0_i32 = arith.constant 0 : i32
    %c0_i32_0 = arith.constant 0 : i32
    return %arg0, %c0_i32 : i32, i32
  }
  func.func @transform_2(%arg0: i32) -> (i32, i32) {
    %c0_i32 = arith.constant 0 : i32
    %c0_i32_0 = arith.constant 0 : i32
    %c0_i32_1 = arith.constant 0 : i32
    return %c0_i32, %c0_i32_0 : i32, i32
  }
  func.func @transform_3(%arg0: i32) -> (i32, i32) {
    %c0_i32 = arith.constant 0 : i32
    %c0_i32_0 = arith.constant 0 : i32
    %c0_i32_1 = arith.constant 0 : i32
    return %c0_i32, %c0_i32_0 : i32, i32
  }
  func.func @transform_4(%arg0: i32) -> (i32, i32, i32) {
    %c0_i32 = arith.constant 0 : i32
    %c0_i32_0 = arith.constant 0 : i32
    %c0_i32_1 = arith.constant 0 : i32
    return %arg0, %c0_i32, %c0_i32_0 : i32, i32, i32
  }
}

</mosaic_0001>

<llo_original>
// kernel: fhead_forward.1
$region0: #{fhead_forward.1}
  #allocation0 [shape = 'u32[]', space=smem, size = 0x4, offset = 0x4, fixed_abs, tag = 'smem constant byte address 0x4 - core index']
  #allocation1 [shape = 'u32[72,128]{1,0:T(1,128)}', space=vmem, size = 0x9000, scoped, tag = 'internal scratch']
  %s0 = inlined_call_operand.vmem [shape: f32[3], index: 0, kind: input, shape index: {}]
  %s1 = inlined_call_operand.vmem [shape: f32[8,128], index: 1, kind: input, shape index: {}]
  %s2 = inlined_call_operand.vmem [shape: bf16[128,64], index: 2, kind: input, shape index: {}]
  %s3 = inlined_call_operand.vmem [shape: f32[2,64], index: 3, kind: input, shape index: {}]
  %s4 = inlined_call_operand.vmem [shape: f32[1,1,128], index: 4, kind: output, shape index: {}]
  %s5 = sld [smem:[#allocation0]]
  $region30: #{fhead_forward.1} parent=0
    _
  %s7 = ssub.s32 1, %s5
  %s8 = scalar_select 0, %s7, %s5
  $region1: #{fhead_forward.1} parent=0
    #allocation2 [shape = 'u8[512]{0}', space=smem, size = 0x200, scoped, tag = 'input window, operand 0, single buffered']
    #allocation3 [shape = 's32[1]{0}', space=sflag, size = 0x4, scoped, tag = 'scoped memory for fhead_forward.1']
    %9 = vsyncpa [#allocation3], 0
    // Predicated region
    $region2: #{fhead_forward.1} parent=1 // pred_check
      _
    $region3: #{fhead_forward.1} parent=1 // pred_check_branch
      %11 = sbr.rel (0) target = $region5
    $region4: #{fhead_forward.1} parent=1 // pred_region
      %13 = vsyncadd [#allocation3], 0
      %s15 = sshll.u32 %s0, 4
      %s16 = int_to_ptr.vmem [resolvable:$true] %s15
      %18 = dma.vmem_to_smem %s16, 16, [#allocation2], [#allocation3]
    $region5: #{fhead_forward.1} parent=1 // pred_fallthru
      _
    // Predicated region
    $region6: #{fhead_forward.1} parent=1 // pred_check
      _
    $region7: #{fhead_forward.1} parent=1 // pred_check_branch
      %20 = sbr.rel (0) target = $region9
    $region8: #{fhead_forward.1} parent=1 // pred_region
      _
    $region9: #{fhead_forward.1} parent=1 // pred_fallthru
      _
    // Predicated region
    $region10: #{fhead_forward.1} parent=1 // pred_check
      _
    $region11: #{fhead_forward.1} parent=1 // pred_check_branch
      %22 = sbr.rel (0) target = $region13
    $region12: #{fhead_forward.1} parent=1 // pred_region
      _
    $region13: #{fhead_forward.1} parent=1 // pred_fallthru
      _
    // Predicated region
    $region14: #{fhead_forward.1} parent=1 // pred_check
      _
    $region15: #{fhead_forward.1} parent=1 // pred_check_branch
      %24 = sbr.rel (0) target = $region17
    $region16: #{fhead_forward.1} parent=1 // pred_region
      _
    $region17: #{fhead_forward.1} parent=1 // pred_fallthru
      _
    // Predicated region
    $region18: #{fhead_forward.1} parent=1 // pred_check
      _
    $region19: #{fhead_forward.1} parent=1 // pred_check_branch
      %26 = sbr.rel (0) target = $region21
    $region20: #{fhead_forward.1} parent=1 // pred_region
      %28 = dma.done [#allocation3], 16
    $region21: #{fhead_forward.1} parent=1 // pred_fallthru
      _
    %29 = sfence
    %s30 = sld [smem:[#allocation2]]
    %s31 = sld [smem:[#allocation2 + $0x1]]
    %s32 = sld [smem:[#allocation2 + $0x2]]
    %v33 = vld [vmem:[%s1] sm:$0xff]
    %v34 = vld [vmem:[%s1 + $0x8] sm:$0xff]
    %v35 = vld [vmem:[%s1 + $0x10] sm:$0xff]
    %v36 = vld [vmem:[%s1 + $0x18] sm:$0xff]
    %v37 = vld [vmem:[%s1 + $0x20] sm:$0xff]
    %v38 = vld [vmem:[%s1 + $0x28] sm:$0xff]
    %v39 = vld [vmem:[%s1 + $0x30] sm:$0xff]
    %v40 = vld [vmem:[%s1 + $0x38] sm:$0xff]
    %v41 = vld [vmem:[%s1 + $0x40] sm:$0xff]
    %v42 = vld [vmem:[%s1 + $0x48] sm:$0xff]
    %v43 = vld [vmem:[%s1 + $0x50] sm:$0xff]
    %v44 = vld [vmem:[%s1 + $0x58] sm:$0xff]
    %v45 = vld [vmem:[%s1 + $0x60] sm:$0xff]
    %v46 = vld [vmem:[%s1 + $0x68] sm:$0xff]
    %v47 = vld [vmem:[%s1 + $0x70] sm:$0xff]
    %v48 = vld [vmem:[%s1 + $0x78] sm:$0xff]
    %v49 = vpack.c.bf16 %v34, %v33
    %v50 = vpack.c.bf16 %v36, %v35
    %v51 = vpack.c.bf16 %v38, %v37
    %v52 = vpack.c.bf16 %v40, %v39
    %v53 = vpack.c.bf16 %v42, %v41
    %v54 = vpack.c.bf16 %v44, %v43
    %v55 = vpack.c.bf16 %v46, %v45
    %v56 = vpack.c.bf16 %v48, %v47
    %v57 = vld [vmem:[%s2] sm:$0xf]
    %v58 = vld [vmem:[%s2 + $0x4] sm:$0xf]
    %v59 = vld [vmem:[%s2 + $0x8] sm:$0xf]
    %v60 = vld [vmem:[%s2 + $0xc] sm:$0xf]
    %v61 = vld [vmem:[%s2 + $0x10] sm:$0xf]
    %v62 = vld [vmem:[%s2 + $0x14] sm:$0xf]
    %v63 = vld [vmem:[%s2 + $0x18] sm:$0xf]
    %v64 = vld [vmem:[%s2 + $0x1c] sm:$0xf]
    %v65 = vld [vmem:[%s2 + $0x20] sm:$0xf]
    %v66 = vld [vmem:[%s2 + $0x24] sm:$0xf]
    %v67 = vld [vmem:[%s2 + $0x28] sm:$0xf]
    %v68 = vld [vmem:[%s2 + $0x2c] sm:$0xf]
    %v69 = vld [vmem:[%s2 + $0x30] sm:$0xf]
    %v70 = vld [vmem:[%s2 + $0x34] sm:$0xf]
    %v71 = vld [vmem:[%s2 + $0x38] sm:$0xf]
    %v72 = vld [vmem:[%s2 + $0x3c] sm:$0xf]
    %v73 = vld [vmem:[%s3] sm:$0x1]
    %v74 = vld [vmem:[%s3 + $0x1] sm:$0x1]
    %v75 = vperm.slane %v73, 0
    %v92 = vunpack.c.l.b16 %v57
    %v93 = vunpack.c.l.b16 %v58
    %v94 = vunpack.c.l.b16 %v59
    %v95 = vunpack.c.l.b16 %v60
    %v96 = vunpack.c.l.b16 %v61
    %v97 = vunpack.c.l.b16 %v62
    %v98 = vunpack.c.l.b16 %v63
    %v99 = vunpack.c.l.b16 %v64
    %v100 = vunpack.c.l.b16 %v65
    %v101 = vunpack.c.l.b16 %v66
    %v102 = vunpack.c.l.b16 %v67
    %v103 = vunpack.c.l.b16 %v68
    %v104 = vunpack.c.l.b16 %v69
    %v105 = vunpack.c.l.b16 %v70
    %v106 = vunpack.c.l.b16 %v71
    %v107 = vunpack.c.l.b16 %v72
    %v108 = vpack.c.b16 %v93, %v92
    %v109 = vpack.c.b16 %v95, %v94
    %v110 = vpack.c.b16 %v97, %v96
    %v111 = vpack.c.b16 %v99, %v98
    %v112 = vpack.c.b16 %v101, %v100
    %v113 = vpack.c.b16 %v103, %v102
    %v114 = vpack.c.b16 %v105, %v104
    %v115 = vpack.c.b16 %v107, %v106
    %124 = vmatpush.bf16.msra.mxu0 %v115
    %125 = vmatpush.bf16.msra.mxu0 %v114
    %126 = vmatpush.bf16.msra.mxu0 %v113
    %127 = vmatpush.bf16.msra.mxu0 %v112
    %128 = vmatpush.bf16.msra.mxu0 %v111
    %129 = vmatpush.bf16.msra.mxu0 %v110
    %130 = vmatpush.bf16.msra.mxu0 %v109
    %131 = vmatpush.bf16.msra.mxu0 %v108
    %132 = vmatmul.bf16.gmra.mxu0 %v49
    %v133 = vpop.f32.mrf.mxu0
    %v134 = vadd.f32 %v75, %v133
    %v135 = vpop.f32.mrf.mxu0
    %v136 = vadd.f32 %v75, %v135
    %137 = vmatmul.bf16.gmra.mxu0 %v50
    %v138 = vpop.f32.mrf.mxu0
    %v139 = vadd.f32 %v75, %v138
    %v140 = vpop.f32.mrf.mxu0
    %v141 = vadd.f32 %v75, %v140
    %142 = vmatmul.bf16.gmra.mxu0 %v51
    %v143 = vpop.f32.mrf.mxu0
    %v144 = vadd.f32 %v75, %v143
    %v145 = vpop.f32.mrf.mxu0
    %v146 = vadd.f32 %v75, %v145
    %147 = vmatmul.bf16.gmra.mxu0 %v52
    %v148 = vpop.f32.mrf.mxu0
    %v149 = vadd.f32 %v75, %v148
    %v150 = vpop.f32.mrf.mxu0
    %v151 = vadd.f32 %v75, %v150
    %152 = vmatmul.bf16.gmra.mxu0 %v53
    %v153 = vpop.f32.mrf.mxu0
    %v154 = vadd.f32 %v75, %v153
    %v155 = vpop.f32.mrf.mxu0
    %v156 = vadd.f32 %v75, %v155
    %157 = vmatmul.bf16.gmra.mxu0 %v54
    %v158 = vpop.f32.mrf.mxu0
    %v159 = vadd.f32 %v75, %v158
    %v160 = vpop.f32.mrf.mxu0
    %v161 = vadd.f32 %v75, %v160
    %162 = vmatmul.bf16.gmra.mxu0 %v55
    %v163 = vpop.f32.mrf.mxu0
    %v164 = vadd.f32 %v75, %v163
    %v165 = vpop.f32.mrf.mxu0
    %v166 = vadd.f32 %v75, %v165
    %167 = vmatmul.bf16.gmra.mxu0 %v56
    %v168 = vpop.f32.mrf.mxu0
    %v169 = vadd.f32 %v75, %v168
    %v170 = vpop.f32.mrf.mxu0
    %v171 = vadd.f32 %v75, %v170
    %172 = vdwg.mxu0
    %s173 = smul.f32 %s30, 0.5
    %v174 = vmul.f32 %v134, 0.5
    %v175 = vmul.f32 %v136, 0.5
    %v176 = vmul.f32 %v139, 0.5
    %v177 = vmul.f32 %v141, 0.5
    %v178 = vmul.f32 %v144, 0.5
    %v179 = vmul.f32 %v146, 0.5
    %v180 = vmul.f32 %v149, 0.5
    %v181 = vmul.f32 %v151, 0.5
    %v182 = vmul.f32 %v154, 0.5
    %v183 = vmul.f32 %v156, 0.5
    %v184 = vmul.f32 %v159, 0.5
    %v185 = vmul.f32 %v161, 0.5
    %v186 = vmul.f32 %v164, 0.5
    %v187 = vmul.f32 %v166, 0.5
    %v188 = vmul.f32 %v169, 0.5
    %v189 = vmul.f32 %v171, 0.5
    %v190 = vstv %s173
    %v191 = vmul.f32 %v190, %v134
    %v192 = vmul.f32 %v190, %v136
    %v193 = vmul.f32 %v190, %v139
    %v194 = vmul.f32 %v190, %v141
    %v195 = vmul.f32 %v190, %v144
    %v196 = vmul.f32 %v190, %v146
    %v197 = vmul.f32 %v190, %v149
    %v198 = vmul.f32 %v190, %v151
    %v199 = vmul.f32 %v190, %v154
    %v200 = vmul.f32 %v190, %v156
    %v201 = vmul.f32 %v190, %v159
    %v202 = vmul.f32 %v190, %v161
    %v203 = vmul.f32 %v190, %v164
    %v204 = vmul.f32 %v190, %v166
    %v205 = vmul.f32 %v190, %v169
    %v206 = vmul.f32 %v190, %v171
    %v207 = vtanh.pop %v191
    %v208 = vtanh.pop %v192
    %v209 = vtanh.pop %v193
    %v210 = vtanh.pop %v194
    %v211 = vtanh.pop %v195
    %v212 = vtanh.pop %v196
    %v213 = vtanh.pop %v197
    %v214 = vtanh.pop %v198
    %v215 = vtanh.pop %v199
    %v216 = vtanh.pop %v200
    %v217 = vtanh.pop %v201
    %v218 = vtanh.pop %v202
    %v219 = vtanh.pop %v203
    %v220 = vtanh.pop %v204
    %v221 = vtanh.pop %v205
    %v222 = vtanh.pop %v206
    %v223 = vadd.f32 %v207, 1.0
    %v224 = vadd.f32 %v208, 1.0
    %v225 = vadd.f32 %v209, 1.0
    %v226 = vadd.f32 %v210, 1.0
    %v227 = vadd.f32 %v211, 1.0
    %v228 = vadd.f32 %v212, 1.0
    %v229 = vadd.f32 %v213, 1.0
    %v230 = vadd.f32 %v214, 1.0
    %v231 = vadd.f32 %v215, 1.0
    %v232 = vadd.f32 %v216, 1.0
    %v233 = vadd.f32 %v217, 1.0
    %v234 = vadd.f32 %v218, 1.0
    %v235 = vadd.f32 %v219, 1.0
    %v236 = vadd.f32 %v220, 1.0
    %v237 = vadd.f32 %v221, 1.0
    %v238 = vadd.f32 %v222, 1.0
    %v239 = vmul.f32 %v174, %v223
    %v240 = vmul.f32 %v175, %v224
    %v241 = vmul.f32 %v176, %v225
    %v242 = vmul.f32 %v177, %v226
    %v243 = vmul.f32 %v178, %v227
    %v244 = vmul.f32 %v179, %v228
    %v245 = vmul.f32 %v180, %v229
    %v246 = vmul.f32 %v181, %v230
    %v247 = vmul.f32 %v182, %v231
    %v248 = vmul.f32 %v183, %v232
    %v249 = vmul.f32 %v184, %v233
    %v250 = vmul.f32 %v185, %v234
    %v251 = vmul.f32 %v186, %v235
    %v252 = vmul.f32 %v187, %v236
    %v253 = vmul.f32 %v188, %v237
    %v254 = vmul.f32 %v189, %v238
    %v255 = vperm.slane %v74, 0
    %v256 = vmul.f32 %v239, %v255
    %v257 = vmul.f32 %v240, %v255
    %v258 = vmul.f32 %v241, %v255
    %v259 = vmul.f32 %v242, %v255
    %v260 = vmul.f32 %v243, %v255
    %v261 = vmul.f32 %v244, %v255
    %v262 = vmul.f32 %v245, %v255
    %v263 = vmul.f32 %v246, %v255
    %v264 = vmul.f32 %v247, %v255
    %v265 = vmul.f32 %v248, %v255
    %v266 = vmul.f32 %v249, %v255
    %v267 = vmul.f32 %v250, %v255
    %v268 = vmul.f32 %v251, %v255
    %v269 = vmul.f32 %v252, %v255
    %v270 = vmul.f32 %v253, %v255
    %v271 = vmul.f32 %v254, %v255
    %272 = vxpose.xlu0.b32.start [1/16] %v256, 128
    %273 = vxpose.xlu0.b32.cont [2/16] %v257, 128
    %274 = vxpose.xlu0.b32.cont [3/16] %v258, 128
    %275 = vxpose.xlu0.b32.cont [4/16] %v259, 128
    %276 = vxpose.xlu0.b32.cont [5/16] %v260, 128
    %277 = vxpose.xlu0.b32.cont [6/16] %v261, 128
    %278 = vxpose.xlu0.b32.cont [7/16] %v262, 128
    %279 = vxpose.xlu0.b32.cont [8/16] %v263, 128
    %280 = vxpose.xlu0.b32.cont [9/16] %v264, 128
    %281 = vxpose.xlu0.b32.cont [10/16] %v265, 128
    %282 = vxpose.xlu0.b32.cont [11/16] %v266, 128
    %283 = vxpose.xlu0.b32.cont [12/16] %v267, 128
    %284 = vxpose.xlu0.b32.cont [13/16] %v268, 128
    %285 = vxpose.xlu0.b32.cont [14/16] %v269, 128
    %286 = vxpose.xlu0.b32.cont [15/16] %v270, 128
    %287 = vxpose.xlu0.b32.end [16/16] %v271, 128
    %v288 = vpop.trf.xlu0
    %v289 = vpop.trf.xlu0
    %v290 = vpop.trf.xlu0
    %v291 = vpop.trf.xlu0
    %v292 = vpop.trf.xlu0
    %v293 = vpop.trf.xlu0
    %v294 = vpop.trf.xlu0
    %v295 = vpop.trf.xlu0
    %v296 = vpop.trf.xlu0
    %v297 = vpop.trf.xlu0
    %v298 = vpop.trf.xlu0
    %v299 = vpop.trf.xlu0
    %v300 = vpop.trf.xlu0
    %v301 = vpop.trf.xlu0
    %v302 = vpop.trf.xlu0
    %v303 = vpop.trf.xlu0
    %v304 = vadd.f32 %v288, %v289
    %v305 = vadd.f32 %v304, %v290
    %v306 = vadd.f32 %v305, %v291
    %v307 = vadd.f32 %v306, %v292
    %v308 = vadd.f32 %v307, %v293
    %v309 = vadd.f32 %v308, %v294
    %v310 = vadd.f32 %v309, %v295
    %v311 = vrot.slane %v310, 4
    %v312 = vadd.f32 %v310, %v311
    %v313 = vrot.slane %v312, 2
    %v314 = vadd.f32 %v312, %v313
    %v315 = vrot.slane %v314, 1
    %v316 = vadd.f32 %v314, %v315
    %v317 = vstv %s32
    %v318 = vadd.f32 %v316, %v317
    %v319 = vmul.f32 %v318, 0.5
    %s320 = smul.f32 %s31, 0.5
    %v321 = vstv %s320
    %v322 = vmul.f32 %v321, %v318
    %v323 = vtanh.pop %v322
    %v324 = vadd.f32 %v323, 1.0
    %v325 = vmul.f32 %v319, %v324
    %326 = vst [vmem:[%s4] sm:$0x1] %v325
    // Predicated region
    $region22: #{fhead_forward.1} parent=1 // pred_check
      _
    $region23: #{fhead_forward.1} parent=1 // pred_check_branch
      %328 = sbr.rel (0) target = $region25
    $region24: #{fhead_forward.1} parent=1 // pred_region
      _
    $region25: #{fhead_forward.1} parent=1 // pred_fallthru
      _
    // Predicated region
    $region26: #{fhead_forward.1} parent=1 // pred_check
      _
    $region27: #{fhead_forward.1} parent=1 // pred_check_branch
      %330 = sbr.rel (0) target = $region29
    $region28: #{fhead_forward.1} parent=1 // pred_region
      _
    $region29: #{fhead_forward.1} parent=1 // pred_fallthru
      _
    %331 = vsyncpa [#allocation3], 1

</llo_original>
